<compile_context>
chip_gen: v6e
topology: v6e:2x2x1
jax: 0.10.0
libtpu: 0.0.40
codegen_flags: <defaults>
</compile_context>

<pallas_src>
import functools
import math

import jax
import jax.numpy as jnp
from jax.experimental import pallas as pl
from jax.experimental.pallas import tpu as pltpu


_NCORES = 2  # leading "parallel" grid axis (uses both TensorCores on v7x)


def _round_up(a, b):
    return ((a + b - 1) // b) * b


def _accum_kernel(x_ref, y_ref, g_ref, stats_ref, g_acc, stats_acc):
    """Accumulate raw Gram + per-lane column statistics over row tiles."""
    t = pl.program_id(1)

    @pl.when(t == 0)
    def _init():
        g_acc[...] = jnp.zeros_like(g_acc)
        stats_acc[...] = jnp.zeros_like(stats_acc)

    x = x_ref[...]          # (TM, C), native dtype (f32 or bf16)
    y = y_ref[...]

    # Raw Gram on the MXU with f32 accumulation; norms are folded in later.
    g_acc[...] += jax.lax.dot_general(
        x, y, dimension_numbers=(((0,), (0,)), ((), ())),
        preferred_element_type=jnp.float32)

    xf = x.astype(jnp.float32)
    yf = y.astype(jnp.float32)
    stats_acc[0:1, :] += jnp.sum(xf, axis=0, keepdims=True)        # sum x
    stats_acc[1:2, :] += jnp.sum(xf * xf, axis=0, keepdims=True)   # sum x^2
    stats_acc[2:3, :] += jnp.sum(yf * yf, axis=0, keepdims=True)   # sum y^2

    @pl.when(t == pl.num_programs(1) - 1)
    def _emit():
        g_ref[...] = g_acc[...]
        stats_ref[...] = stats_acc[...]


def _epilogue_kernel(g_ref, stats_ref, o_ref, *, k, c, lamda):
    """Combine core partials, fold packed lanes back to KxK, compute the loss."""
    g = g_ref[0] + g_ref[1]                # (C, C)
    stats = stats_ref[0] + stats_ref[1]    # (3, C)
    sx, sx2, sy2 = stats[0:1, :], stats[1:2, :], stats[2:3, :]

    # fold[a, i] = 1 iff lane a holds cluster i (a % K == i); identity if C == K.
    lane_i = jax.lax.broadcasted_iota(jnp.int32, (c, k), 0) % k
    col_i = jax.lax.broadcasted_iota(jnp.int32, (c, k), 1)
    fold = (lane_i == col_i).astype(jnp.float32)                    # (C, K)

    # Keep only same-sample (diagonal KxK) blocks of the packed Gram.
    ga = jax.lax.broadcasted_iota(jnp.int32, (c, c), 0) // k
    gb = jax.lax.broadcasted_iota(jnp.int32, (c, c), 1) // k
    g_blk = jnp.where(ga == gb, g, 0.0)                             # (C, C)

    def mm(a, b, dims):
        return jax.lax.dot_general(a, b, dimension_numbers=(dims, ((), ())),
                                   preferred_element_type=jnp.float32)

    sx_k = mm(sx, fold, ((1,), (0,)))       # (1, K) cluster marginal sums
    sx2_k = mm(sx2, fold, ((1,), (0,)))     # (1, K) ||x_col||^2
    sy2_k = mm(sy2, fold, ((1,), (0,)))     # (1, K) ||y_col||^2

    eps = jnp.float32(1e-12)                # F.normalize eps
    inv_xn = 1.0 / jnp.maximum(jnp.sqrt(sx2_k), eps)
    inv_yn = 1.0 / jnp.maximum(jnp.sqrt(sy2_k), eps)

    # pui = diag(1/||x||) @ (fold^T g_blk fold) @ diag(1/||y||)
    #     = (fold*inv_xn)^T @ g_blk @ (fold*inv_yn)   (no transposes needed)
    right = mm(g_blk, fold * inv_yn, ((1,), (0,)))                  # (C, K)
    pui = mm(fold * inv_xn, right, ((0,), (0,)))                    # (K, K)

    # Cross entropy with identity targets, mean reduction (stable logsumexp).
    m = jnp.max(pui, axis=1, keepdims=True)
    lse = m + jnp.log(jnp.sum(jnp.exp(pui - m), axis=1, keepdims=True))
    row = jax.lax.broadcasted_iota(jnp.int32, (k, k), 0)
    col = jax.lax.broadcasted_iota(jnp.int32, (k, k), 1)
    diag = jnp.sum(jnp.where(row == col, pui, 0.0), axis=1, keepdims=True)
    loss_ce = jnp.sum(lse - diag) / k

    # Negative-entropy regularizer on the cluster marginal.  Matches PyTorch:
    # no eps guard on log(p) (inputs are strictly positive softmax outputs).
    p = sx_k / jnp.sum(sx_k)
    loss_ne = jnp.float32(math.log(k)) + jnp.sum(p * jnp.log(p))

    o_ref[0] = loss_ce + jnp.float32(lamda) * loss_ne


def pui_loss(x, y, lamda=2.0, tile_rows=512):
    """Partition Uncertainty Index loss (PICA PUILoss.forward) on TPU."""
    assert x.shape == y.shape, "Inputs are required to have same shape"
    n, k = x.shape

    # Lane packing: view (N, K) as (N*K/128, 128) when K divides 128 so that
    # vreg lanes / MXU columns are dense; otherwise keep K lanes (fallback).
    c = 128 if (k <= 128 and 128 % k == 0) else k
    total = n * k
    m = pl.cdiv(total, c)                       # packed rows holding real data

    tm = min(_round_up(tile_rows, 16), _round_up(pl.cdiv(m, _NCORES), 16))
    tiles_per_core = pl.cdiv(m, _NCORES * tm)
    m_pad = _NCORES * tiles_per_core * tm
    pad = m_pad * c - total                     # zero rows: contribute nothing

    def _pack(a):
        a = a.reshape(-1)
        if pad:
            a = jnp.pad(a, (0, pad))            # only copies when misaligned
        return a.reshape(m_pad, c)

    xp, yp = _pack(x), _pack(y)

    row_spec = pl.BlockSpec((tm, c), lambda p, t: (p * tiles_per_core + t, 0))
    g_part, stats_part = pl.pallas_call(
        _accum_kernel,
        out_shape=(jax.ShapeDtypeStruct((_NCORES, c, c), jnp.float32),
                   jax.ShapeDtypeStruct((_NCORES, 3, c), jnp.float32)),
        grid_spec=pltpu.PrefetchScalarGridSpec(
            num_scalar_prefetch=0,
            grid=(_NCORES, tiles_per_core),
            in_specs=[row_spec, row_spec],
            out_specs=(pl.BlockSpec((None, c, c), lambda p, t: (p, 0, 0)),
                       pl.BlockSpec((None, 3, c), lambda p, t: (p, 0, 0))),
            scratch_shapes=[pltpu.VMEM((c, c), jnp.float32),
                            pltpu.VMEM((3, c), jnp.float32)]),
        compiler_params=pltpu.CompilerParams(
            dimension_semantics=("parallel", "arbitrary")),
    )(xp, yp)

    loss = pl.pallas_call(
        functools.partial(_epilogue_kernel, k=k, c=c, lamda=float(lamda)),
        out_shape=jax.ShapeDtypeStruct((1,), jnp.float32),
        in_specs=[pl.BlockSpec(memory_space=pltpu.VMEM),
                  pl.BlockSpec(memory_space=pltpu.VMEM)],
        out_specs=pl.BlockSpec(memory_space=pltpu.SMEM),
    )(g_part, stats_part)
    return loss[0]


def _reference(x, y, lamda=2.0):
    # Pure-JAX reference mirroring the PyTorch code.
    eps = 1e-12
    xn = x / jnp.maximum(jnp.linalg.norm(x, axis=0, keepdims=True), eps)
    yn = y / jnp.maximum(jnp.linalg.norm(y, axis=0, keepdims=True), eps)
    pui = jnp.matmul(xn.T, yn, precision=jax.lax.Precision.HIGHEST)
    k = pui.shape[0]
    lse = jax.scipy.special.logsumexp(pui, axis=1)
    loss_ce = jnp.mean(lse - jnp.diag(pui))
    p = x.sum(0)
    p = p / p.sum()
    loss_ne = math.log(k) + jnp.sum(p * jnp.log(p))
    return loss_ce + lamda * loss_ne


if __name__ == "__main__":
    key = jax.random.PRNGKey(0)
    kx, ky = jax.random.split(key)

    # Small shapes consistent with the module: N samples x K cluster probs.
    n, k = 2000, 8
    x = jax.nn.softmax(jax.random.normal(kx, (n, k), dtype=jnp.float32), axis=1)
    y = jax.nn.softmax(jax.random.normal(ky, (n, k), dtype=jnp.float32), axis=1)

    # Small tile so the multi-step pipelined accumulation path is exercised.
    loss = jax.block_until_ready(pui_loss(x, y, lamda=2.0, tile_rows=16))
    ref = _reference(x, y, lamda=2.0)
    assert jnp.allclose(loss, ref, atol=1e-5, rtol=1e-5), (loss, ref)

    # K that does not divide 128 -> un-packed (C = K) fallback path.
    x2 = jax.nn.softmax(jax.random.normal(kx, (48, 10), dtype=jnp.float32), axis=1)
    y2 = jax.nn.softmax(jax.random.normal(ky, (48, 10), dtype=jnp.float32), axis=1)
    loss2 = jax.block_until_ready(pui_loss(x2, y2, lamda=2.0))
    ref2 = _reference(x2, y2, lamda=2.0)
    assert jnp.allclose(loss2, ref2, atol=1e-5, rtol=1e-5), (loss2, ref2)

    # bf16 streaming path (bf16 fed straight to the MXU, f32 accumulators).
    loss_bf16 = jax.block_until_ready(
        pui_loss(x.astype(jnp.bfloat16), y.astype(jnp.bfloat16), lamda=2.0))
    assert bool(jnp.isfinite(loss_bf16))

    print("KERNEL_OK")
</pallas_src>

<mosaic_0001>
module attributes {stable_mosaic.version = 11 : i64} {
  func.func @_accum_kernel(%arg0: i32, %arg1: i32, %arg2: memref<16x128xf32, #tpu.memory_space<vmem>>, %arg3: memref<16x128xf32, #tpu.memory_space<vmem>>, %arg4: memref<1x128x128xf32, #tpu.memory_space<vmem>>, %arg5: memref<1x3x128xf32, #tpu.memory_space<vmem>>, %arg6: memref<128x128xf32, #tpu.memory_space<vmem>>, %arg7: memref<3x128xf32, #tpu.memory_space<vmem>>) attributes {dimension_semantics = [#tpu.dimension_semantics<parallel>, #tpu.dimension_semantics<arbitrary>], iteration_bounds = array<i64: 2, 4>, scalar_prefetch = 0 : i64, scratch_operands = 2 : i64, tpu.core_type = #tpu.core_type<tc>, window_params = [{transform_indices = @transform_0, window_bounds = array<i64: 16, 128>}, {transform_indices = @transform_1, window_bounds = array<i64: 16, 128>}, {transform_indices = @transform_2, window_bounds = array<i64: 1, 128, 128>}, {transform_indices = @transform_3, window_bounds = array<i64: 1, 3, 128>}]} {
    %c0_i32 = arith.constant 0 : i32
    %0 = arith.cmpi eq, %arg1, %c0_i32 : i32
    %1 = arith.extui %0 : i1 to i32
    %c0_i32_0 = arith.constant 0 : i32
    %2 = arith.cmpi ne, %1, %c0_i32_0 : i32
    scf.if %2 {
      %cst_22 = arith.constant 0.000000e+00 : f32
      %29 = vector.broadcast %cst_22 : f32 to vector<128x128xf32>
      %c0_23 = arith.constant 0 : index
      %c0_24 = arith.constant 0 : index
      %30 = vector.load %arg6[%c0_23, %c0_24] : memref<128x128xf32, #tpu.memory_space<vmem>>, vector<128x128xf32>
      tpu.vector_store %arg6[%c0_23, %c0_24], %29 {strides = array<i32>} : memref<128x128xf32, #tpu.memory_space<vmem>>, vector<128x128xf32>,
      %cst_25 = arith.constant 0.000000e+00 : f32
      %31 = vector.broadcast %cst_25 : f32 to vector<3x128xf32>
      %c0_26 = arith.constant 0 : index
      %c0_27 = arith.constant 0 : index
      %32 = vector.load %arg7[%c0_26, %c0_27] : memref<3x128xf32, #tpu.memory_space<vmem>>, vector<3x128xf32>
      tpu.vector_store %arg7[%c0_26, %c0_27], %31 {strides = array<i32>} : memref<3x128xf32, #tpu.memory_space<vmem>>, vector<3x128xf32>,
    } else {
    }
    %c0 = arith.constant 0 : index
    %c0_1 = arith.constant 0 : index
    %3 = vector.load %arg2[%c0, %c0_1] : memref<16x128xf32, #tpu.memory_space<vmem>>, vector<16x128xf32>
    %c0_2 = arith.constant 0 : index
    %c0_3 = arith.constant 0 : index
    %4 = vector.load %arg3[%c0_2, %c0_3] : memref<16x128xf32, #tpu.memory_space<vmem>>, vector<16x128xf32>
    %c0_4 = arith.constant 0 : index
    %c0_5 = arith.constant 0 : index
    %5 = vector.load %arg6[%c0_4, %c0_5] : memref<128x128xf32, #tpu.memory_space<vmem>>, vector<128x128xf32>
    %cst = arith.constant dense<0.000000e+00> : vector<128x128xf32>
    %6 = tpu.matmul %3, %4, %cst {dimension_numbers = #tpu.dot_dimension_numbers<[0], [0], [1], [1], [0, 1, 1, 1], [], []>} : vector<16x128xf32>, vector<16x128xf32>, vector<128x128xf32> -> vector<128x128xf32>
    %7 = arith.addf %5, %6 : vector<128x128xf32>
    %c0_6 = arith.constant 0 : index
    %c0_7 = arith.constant 0 : index
    %8 = vector.load %arg6[%c0_6, %c0_7] : memref<128x128xf32, #tpu.memory_space<vmem>>, vector<128x128xf32>
    tpu.vector_store %arg6[%c0_6, %c0_7], %7 {strides = array<i32>} : memref<128x128xf32, #tpu.memory_space<vmem>>, vector<128x128xf32>,
    %c0_8 = arith.constant 0 : index
    %c0_9 = arith.constant 0 : index
    %9 = vector.load %arg7[%c0_8, %c0_9] : memref<3x128xf32, #tpu.memory_space<vmem>>, vector<1x128xf32>
    %cst_10 = arith.constant dense<0.000000e+00> : vector<128xf32>
    %10 = vector.multi_reduction <add>, %3, %cst_10 [0] : vector<16x128xf32> to vector<128xf32>
    %11 = vector.shape_cast %10 : vector<128xf32> to vector<1x128xf32>
    %12 = arith.addf %9, %11 : vector<1x128xf32>
    %c0_11 = arith.constant 0 : index
    %c0_12 = arith.constant 0 : index
    %13 = vector.load %arg7[%c0_11, %c0_12] : memref<3x128xf32, #tpu.memory_space<vmem>>, vector<1x128xf32>
    tpu.vector_store %arg7[%c0_11, %c0_12], %12 {strides = array<i32>} : memref<3x128xf32, #tpu.memory_space<vmem>>, vector<1x128xf32>,
    %c1 = arith.constant 1 : index
    %c0_13 = arith.constant 0 : index
    %14 = vector.load %arg7[%c1, %c0_13] : memref<3x128xf32, #tpu.memory_space<vmem>>, vector<1x128xf32>
    %15 = arith.mulf %3, %3 : vector<16x128xf32>
    %cst_14 = arith.constant dense<0.000000e+00> : vector<128xf32>
    %16 = vector.multi_reduction <add>, %15, %cst_14 [0] : vector<16x128xf32> to vector<128xf32>
    %17 = vector.shape_cast %16 : vector<128xf32> to vector<1x128xf32>
    %18 = arith.addf %14, %17 : vector<1x128xf32>
    %c1_15 = arith.constant 1 : index
    %c0_16 = arith.constant 0 : index
    %19 = vector.load %arg7[%c1_15, %c0_16] : memref<3x128xf32, #tpu.memory_space<vmem>>, vector<1x128xf32>
    tpu.vector_store %arg7[%c1_15, %c0_16], %18 {strides = array<i32>} : memref<3x128xf32, #tpu.memory_space<vmem>>, vector<1x128xf32>,
    %c2 = arith.constant 2 : index
    %c0_17 = arith.constant 0 : index
    %20 = vector.load %arg7[%c2, %c0_17] : memref<3x128xf32, #tpu.memory_space<vmem>>, vector<1x128xf32>
    %21 = arith.mulf %4, %4 : vector<16x128xf32>
    %cst_18 = arith.constant dense<0.000000e+00> : vector<128xf32>
    %22 = vector.multi_reduction <add>, %21, %cst_18 [0] : vector<16x128xf32> to vector<128xf32>
    %23 = vector.shape_cast %22 : vector<128xf32> to vector<1x128xf32>
    %24 = arith.addf %20, %23 : vector<1x128xf32>
    %c2_19 = arith.constant 2 : index
    %c0_20 = arith.constant 0 : index
    %25 = vector.load %arg7[%c2_19, %c0_20] : memref<3x128xf32, #tpu.memory_space<vmem>>, vector<1x128xf32>
    tpu.vector_store %arg7[%c2_19, %c0_20], %24 {strides = array<i32>} : memref<3x128xf32, #tpu.memory_space<vmem>>, vector<1x128xf32>,
    %c3_i32 = arith.constant 3 : i32
    %26 = arith.cmpi eq, %arg1, %c3_i32 : i32
    %27 = arith.extui %26 : i1 to i32
    %c0_i32_21 = arith.constant 0 : i32
    %28 = arith.cmpi ne, %27, %c0_i32_21 : i32
    scf.if %28 {
      %c0_22 = arith.constant 0 : index
      %c0_23 = arith.constant 0 : index
      %29 = vector.load %arg6[%c0_22, %c0_23] : memref<128x128xf32, #tpu.memory_space<vmem>>, vector<128x128xf32>
      %c0_24 = arith.constant 0 : index
      %c0_25 = arith.constant 0 : index
      %c0_26 = arith.constant 0 : index
      %30 = vector.load %arg4[%c0_24, %c0_25, %c0_26] : memref<1x128x128xf32, #tpu.memory_space<vmem>>, vector<1x128x128xf32>
      %31 = vector.shape_cast %30 : vector<1x128x128xf32> to vector<128x128xf32>
      %32 = vector.shape_cast %29 : vector<128x128xf32> to vector<1x128x128xf32>
      tpu.vector_store %arg4[%c0_24, %c0_25, %c0_26], %32 {strides = array<i32>} : memref<1x128x128xf32, #tpu.memory_space<vmem>>, vector<1x128x128xf32>,
      %c0_27 = arith.constant 0 : index
      %c0_28 = arith.constant 0 : index
      %33 = vector.load %arg7[%c0_27, %c0_28] : memref<3x128xf32, #tpu.memory_space<vmem>>, vector<3x128xf32>
      %c0_29 = arith.constant 0 : index
      %c0_30 = arith.constant 0 : index
      %c0_31 = arith.constant 0 : index
      %34 = vector.load %arg5[%c0_29, %c0_30, %c0_31] : memref<1x3x128xf32, #tpu.memory_space<vmem>>, vector<1x3x128xf32>
      %35 = vector.shape_cast %34 : vector<1x3x128xf32> to vector<3x128xf32>
      %36 = vector.shape_cast %33 : vector<3x128xf32> to vector<1x3x128xf32>
      tpu.vector_store %arg5[%c0_29, %c0_30, %c0_31], %36 {strides = array<i32>} : memref<1x3x128xf32, #tpu.memory_space<vmem>>, vector<1x3x128xf32>,
    } else {
    }
    return
  }
  func.func @transform_0(%arg0: i32, %arg1: i32) -> (i32, i32) {
    %c4_i32 = arith.constant 4 : i32
    %0 = arith.muli %arg0, %c4_i32 : i32
    %1 = arith.addi %0, %arg1 : i32
    %c0_i32 = arith.constant 0 : i32
    %c0_i32_0 = arith.constant 0 : i32
    return %1, %c0_i32 : i32, i32
  }
  func.func @transform_1(%arg0: i32, %arg1: i32) -> (i32, i32) {
    %c4_i32 = arith.constant 4 : i32
    %0 = arith.muli %arg0, %c4_i32 : i32
    %1 = arith.addi %0, %arg1 : i32
    %c0_i32 = arith.constant 0 : i32
    %c0_i32_0 = arith.constant 0 : i32
    return %1, %c0_i32 : i32, i32
  }
  func.func @transform_2(%arg0: i32, %arg1: i32) -> (i32, i32, i32) {
    %c0_i32 = arith.constant 0 : i32
    %c0_i32_0 = arith.constant 0 : i32
    %c0_i32_1 = arith.constant 0 : i32
    return %arg0, %c0_i32, %c0_i32_0 : i32, i32, i32
  }
  func.func @transform_3(%arg0: i32, %arg1: i32) -> (i32, i32, i32) {
    %c0_i32 = arith.constant 0 : i32
    %c0_i32_0 = arith.constant 0 : i32
    %c0_i32_1 = arith.constant 0 : i32
    return %arg0, %c0_i32, %c0_i32_0 : i32, i32, i32
  }
}

</mosaic_0001>

<llo_original>
// kernel: tpu_custom_call.1
$region0: #{tpu_custom_call.1}
  #allocation0 [shape = 'u32[]', space=smem, size = 0x4, offset = 0x4, fixed_abs, tag = 'smem constant byte address 0x4 - core index']
  #allocation1 [shape = 'u32[144,128]{1,0:T(1,128)}', space=vmem, size = 0x12000, scoped, tag = 'internal scratch']
  #allocation2 [shape = 'f32[128,128]{1,0:T(8,128)}', space=vmem, size = 0x10000, scoped, tag = 'scratch operand']
  #allocation3 [shape = 'f32[3,128]{1,0:T(4,128)}', space=vmem, size = 0x800, scoped, tag = 'scratch operand']
  %s0 = inlined_call_operand.hbm [shape: f32[128,128], index: 0, kind: input, shape index: {}]
  %s1 = inlined_call_operand.hbm [shape: f32[128,128], index: 1, kind: input, shape index: {}]
  %s2 = inlined_call_operand.hbm [shape: f32[2,128,128], index: 2, kind: output, shape index: {0}]
  %s3 = inlined_call_operand.vmem [shape: f32[2,3,128], index: 3, kind: output, shape index: {1}]
  %4 = xla_tuple %s2, %s3
  %s5 = sld [smem:[#allocation0]]
  $region65: #{tpu_custom_call.1} parent=0
    _
  %s7 = ssub.s32 1, %s5
  %s8 = scalar_select 0, %s7, %s5
  $region1: #{tpu_custom_call.1} parent=0
    #allocation4 [shape = 'u8[16384]{0}', space=vmem, size = 0x4000, scoped, tag = 'input window, operand 0']
    #allocation5 [shape = 's32[2]{0}', space=sflag, size = 0x8, scoped, tag = 'scoped memory for tpu_custom_call.1']
    #allocation6 [shape = 's32[2]{0}', space=sflag, size = 0x8, scoped, tag = 'scoped memory for tpu_custom_call.1']
    #allocation7 [shape = 'u8[16384]{0}', space=vmem, size = 0x4000, scoped, tag = 'input window, operand 1']
    #allocation8 [shape = 's32[2]{0}', space=sflag, size = 0x8, scoped, tag = 'scoped memory for tpu_custom_call.1']
    #allocation9 [shape = 'u8[131072]{0}', space=vmem, size = 0x20000, scoped, tag = 'output window, operand 0']
    %9 = vsyncpa [#allocation5], 0
    %s10 = scalar_lea.sflag [#allocation5], 1
    %11 = vsyncpa %s10, 0
    %12 = vsyncpa [#allocation8], 0
    %s13 = scalar_lea.sflag [#allocation8], 1
    %14 = vsyncpa %s13, 0
    %15 = vsyncpa [#allocation6], 0
    %s16 = scalar_lea.sflag [#allocation6], 1
    %17 = vsyncpa %s16, 0
    loop: start=0, step=1, limit=10
    $region2: #{tpu_custom_call.1} parent=1 // loop_pre_header
      _
    $region3: #{tpu_custom_call.1} parent=1 // loop_header
      %s19 = sphi 0, %s23
      %p20 = scmp.ge.s32.totalorder %s19, 10
      %s26 = sphi 0, %s38
      %s27 = sphi 0, %s34
      %s28 = sphi 0, %s26
      %s29 = sphi 0, %s27
      %s30 = sphi 0, %s28
      %s31 = sphi 0, %s29
      %s45 = sphi 0, %s47
      %s48 = sphi 0, %s45
      %s49 = sphi 0, %s48
      %s65 = sphi 0, %s49
      %s75 = sphi 0, %s77
      %s78 = sphi 0, %s75
      %s79 = sphi 0, %s78
      %s95 = sphi 0, %s79
      %s101 = sphi 0, %s103
      %s104 = sphi 0, %s101
      %s105 = sphi 0, %s104
      %s121 = sphi 0, %s105
      %s127 = sphi 0, %s129
      %s130 = sphi 0, %s127
      %s131 = sphi 0, %s130
      %s147 = sphi 0, %s131
    $region4: #{tpu_custom_call.1} parent=1 // loop_header_branch
      %22 = sbr.rel (%p20) target = $region8
    $region5: #{tpu_custom_call.1} parent=1 // loop_body
      %s24 = ssub.s32 %s19, 1
      %s25 = ssub.s32 %s19, 2
      %s32 = sadd.s32 1, %s27
      %p33 = scmp.ge.s32.totalorder %s32, 4
      %s34 = scalar_select %p33, 0, %s32
      %s35 = sadd.s32 1, %s26
      %s36 = scalar_select %p33, %s35, %s26
      %p37 = scmp.ge.s32.totalorder %s36, 2
      %s38 = scalar_select %p37, 0, %s36
      %s39 = smul.u32 %s26, 4
      %s40 = sadd.s32 %s39, %s27
      %s41 = smul.u32 %s38, 4
      %s42 = sadd.s32 %s41, %s34
      %s43 = ssub.s32 %s40, %s42
      %p44 = scmp.eq.s32.totalorder %s43, 0
      %s46 = sadd.s32 %s45, 1
      %s47 = scalar_select %p44, %s45, %s46
      %p50 = pneg %p44
      %p51 = scmp.eq.s32.totalorder %s19, 7
      %p52 = por %p50, %p51
      %p53 = scmp.ne.s32.totalorder %s45, %s48
      %p54 = scmp.eq.s32.totalorder %s19, 0
      %p55 = por %p53, %p54
      %p56 = scmp.ne.s32.totalorder %s45, %s48
      %p57 = scmp.eq.s32.totalorder %s24, 7
      %p58 = por %p56, %p57
      %p59 = scmp.ne.s32.totalorder %s48, %s49
      %p60 = scmp.eq.s32.totalorder %s24, 0
      %p61 = por %p59, %p60
      %p62 = scmp.ne.s32.totalorder %s48, %s49
      %p63 = scmp.eq.s32.totalorder %s25, 7
      %p64 = por %p62, %p63
      %p66 = scmp.ne.s32.totalorder %s49, %s65
      %p67 = scmp.eq.s32.totalorder %s25, 0
      %p68 = por %p66, %p67
      %s69 = smul.u32 %s26, 4
      %s70 = sadd.s32 %s69, %s27
      %s71 = smul.u32 %s38, 4
      %s72 = sadd.s32 %s71, %s34
      %s73 = ssub.s32 %s70, %s72
      %p74 = scmp.eq.s32.totalorder %s73, 0
      %s76 = sadd.s32 %s75, 1
      %s77 = scalar_select %p74, %s75, %s76
      %p80 = pneg %p74
      %p81 = scmp.eq.s32.totalorder %s19, 7
      %p82 = por %p80, %p81
      %p83 = scmp.ne.s32.totalorder %s75, %s78
      %p84 = scmp.eq.s32.totalorder %s19, 0
      %p85 = por %p83, %p84
      %p86 = scmp.ne.s32.totalorder %s75, %s78
      %p87 = scmp.eq.s32.totalorder %s24, 7
      %p88 = por %p86, %p87
      %p89 = scmp.ne.s32.totalorder %s78, %s79
      %p90 = scmp.eq.s32.totalorder %s24, 0
      %p91 = por %p89, %p90
      %p92 = scmp.ne.s32.totalorder %s78, %s79
      %p93 = scmp.eq.s32.totalorder %s25, 7
      %p94 = por %p92, %p93
      %p96 = scmp.ne.s32.totalorder %s79, %s95
      %p97 = scmp.eq.s32.totalorder %s25, 0
      %p98 = por %p96, %p97
      %s99 = ssub.s32 %s26, %s38
      %p100 = scmp.eq.s32.totalorder %s99, 0
      %s102 = sadd.s32 %s101, 1
      %s103 = scalar_select %p100, %s101, %s102
      %p106 = pneg %p100
      %p107 = scmp.eq.s32.totalorder %s19, 7
      %p108 = por %p106, %p107
      %p109 = scmp.ne.s32.totalorder %s101, %s104
      %p110 = scmp.eq.s32.totalorder %s19, 0
      %p111 = por %p109, %p110
      %p112 = scmp.ne.s32.totalorder %s101, %s104
      %p113 = scmp.eq.s32.totalorder %s24, 7
      %p114 = por %p112, %p113
      %p115 = scmp.ne.s32.totalorder %s104, %s105
      %p116 = scmp.eq.s32.totalorder %s24, 0
      %p117 = por %p115, %p116
      %p118 = scmp.ne.s32.totalorder %s104, %s105
      %p119 = scmp.eq.s32.totalorder %s25, 7
      %p120 = por %p118, %p119
      %p122 = scmp.ne.s32.totalorder %s105, %s121
      %p123 = scmp.eq.s32.totalorder %s25, 0
      %p124 = por %p122, %p123
      %s125 = ssub.s32 %s26, %s38
      %p126 = scmp.eq.s32.totalorder %s125, 0
      %s128 = sadd.s32 %s127, 1
      %s129 = scalar_select %p126, %s127, %s128
      %p132 = pneg %p126
      %p133 = scmp.eq.s32.totalorder %s19, 7
      %p134 = por %p132, %p133
      %p135 = scmp.ne.s32.totalorder %s127, %s130
      %p136 = scmp.eq.s32.totalorder %s19, 0
      %p137 = por %p135, %p136
      %p138 = scmp.ne.s32.totalorder %s127, %s130
      %p139 = scmp.eq.s32.totalorder %s24, 7
      %p140 = por %p138, %p139
      %p141 = scmp.ne.s32.totalorder %s130, %s131
      %p142 = scmp.eq.s32.totalorder %s24, 0
      %p143 = por %p141, %p142
      %p144 = scmp.ne.s32.totalorder %s130, %s131
      %p145 = scmp.eq.s32.totalorder %s25, 7
      %p146 = por %p144, %p145
      %p148 = scmp.ne.s32.totalorder %s131, %s147
      %p149 = scmp.eq.s32.totalorder %s25, 0
      %p150 = por %p148, %p149
      %p151 = scmp.le.s32.totalorder 1, %s19
      %p152 = scmp.lt.s32.totalorder %s19, 9
      %p153 = pnand %p151, %p152
      %p154 = pneg %p153
      // Predicated region
      $region9: #{tpu_custom_call.1} parent=5 // pred_check
        _
      $region10: #{tpu_custom_call.1} parent=5 // pred_check_branch
        %156 = sbr.rel (%p153) target = $region12
      $region11: #{tpu_custom_call.1} parent=5 // pred_region
        %s157 = ssub.s32 %s19, 1
      $region12: #{tpu_custom_call.1} parent=5 // pred_fallthru
        _
      %p158 = scmp.lt.s32.totalorder %s19, 8
      // Predicated region
      $region13: #{tpu_custom_call.1} parent=5 // pred_check
        %p159 = pneg %p158
      $region14: #{tpu_custom_call.1} parent=5 // pred_check_branch
        %161 = sbr.rel (%p159) target = $region16
      $region15: #{tpu_custom_call.1} parent=5 // pred_region
        // Predicated region
        $region17: #{tpu_custom_call.1} parent=15 // pred_check
          %p162 = pneg %p55
        $region18: #{tpu_custom_call.1} parent=15 // pred_check_branch
          %164 = sbr.rel (%p162) target = $region20
        $region19: #{tpu_custom_call.1} parent=15 // pred_region
          %s165 = sand.u32 %s45, 1
          %s166 = scalar_lea.sflag [#allocation5], %s165
          %s167 = sand.u32 %s45, 1
          %s168 = smul.addr %s167, 16
          %s169 = scalar_lea.vmem [#allocation4], %s168
          %s170 = smul.u32 %s26, 4
          %s171 = sadd.s32 %s170, %s27
          %s172 = smul.u32 2, %s171
          %s174 = ssub.s32 256, 256
          %175 = vsyncadd %s166, %s174
          %s176 = smul.addr %s172, 128
          %s177 = scalar_lea.hbm %s0, %s176
          %s178 = sshll.u32 %s169, 4
          %s179 = int_to_ptr.vmem [resolvable:$true] %s178
          %184 = dma.hbm_to_vmem [thread:$0]  %s177, 256, %s179, %s166, 128, 128, 8
        $region20: #{tpu_custom_call.1} parent=15 // pred_fallthru
          _
        // Predicated region
        $region21: #{tpu_custom_call.1} parent=15 // pred_check
          %p185 = pneg %p85
        $region22: #{tpu_custom_call.1} parent=15 // pred_check_branch
          %187 = sbr.rel (%p185) target = $region24
        $region23: #{tpu_custom_call.1} parent=15 // pred_region
          %s188 = sand.u32 %s75, 1
          %s189 = scalar_lea.sflag [#allocation8], %s188
          %s190 = sand.u32 %s75, 1
          %s191 = smul.addr %s190, 16
          %s192 = scalar_lea.vmem [#allocation7], %s191
          %s193 = smul.u32 %s26, 4
          %s194 = sadd.s32 %s193, %s27
          %s195 = smul.u32 2, %s194
          %s197 = ssub.s32 256, 256
          %198 = vsyncadd %s189, %s197
          %s199 = smul.addr %s195, 128
          %s200 = scalar_lea.hbm %s1, %s199
          %s201 = sshll.u32 %s192, 4
          %s202 = int_to_ptr.vmem [resolvable:$true] %s201
          %207 = dma.hbm_to_vmem [thread:$0]  %s200, 256, %s202, %s189, 128, 128, 8
        $region24: #{tpu_custom_call.1} parent=15 // pred_fallthru
          _
      $region16: #{tpu_custom_call.1} parent=5 // pred_fallthru
        _
      %p208 = scmp.le.s32.totalorder 1, %s19
      %p209 = scmp.lt.s32.totalorder %s19, 9
      %p210 = pnand %p208, %p209
      %p211 = pneg %p210
      // Predicated region
      $region25: #{tpu_custom_call.1} parent=5 // pred_check
        _
      $region26: #{tpu_custom_call.1} parent=5 // pred_check_branch
        %213 = sbr.rel (%p210) target = $region28
      $region27: #{tpu_custom_call.1} parent=5 // pred_region
        %s214 = ssub.s32 %s19, 1
        %s215 = sand.u32 %s48, 1
        %s216 = scalar_lea.sflag [#allocation5], %s215
        %s217 = sand.u32 %s48, 1
        %s218 = smul.addr %s217, 16
        %s219 = scalar_lea.vmem [#allocation4], %s218
        // Predicated region
        $region29: #{tpu_custom_call.1} parent=27 // pred_check
          %p220 = pneg %p61
        $region30: #{tpu_custom_call.1} parent=27 // pred_check_branch
          %222 = sbr.rel (%p220) target = $region32
        $region31: #{tpu_custom_call.1} parent=27 // pred_region
          %223 = dma.done %s216, 256
        $region32: #{tpu_custom_call.1} parent=27 // pred_fallthru
          _
        %s224 = sand.u32 %s78, 1
        %s225 = scalar_lea.sflag [#allocation8], %s224
        %s226 = sand.u32 %s78, 1
        %s227 = smul.addr %s226, 16
        %s228 = scalar_lea.vmem [#allocation7], %s227
        // Predicated region
        $region33: #{tpu_custom_call.1} parent=27 // pred_check
          %p229 = pneg %p91
        $region34: #{tpu_custom_call.1} parent=27 // pred_check_branch
          %231 = sbr.rel (%p229) target = $region36
        $region35: #{tpu_custom_call.1} parent=27 // pred_region
          %232 = dma.done %s225, 256
        $region36: #{tpu_custom_call.1} parent=27 // pred_fallthru
          _
        %s233 = sand.u32 %s48, 1
        %s234 = scalar_lea.sflag [#allocation5], %s233
        %s235 = sand.u32 %s48, 1
        %s236 = smul.addr %s235, 16
        %s237 = scalar_lea.vmem [#allocation4], %s236
        %p238 = pneg %p61
        %p239 = pneg %p58
        %s240 = sand.u32 %s78, 1
        %s241 = scalar_lea.sflag [#allocation8], %s240
        %s242 = sand.u32 %s78, 1
        %s243 = smul.addr %s242, 16
        %s244 = scalar_lea.vmem [#allocation7], %s243
        %p245 = pneg %p91
        %p246 = pneg %p88
        %p247 = pneg %p117
        %p248 = pneg %p114
        %s249 = sand.u32 %s104, 1
        %s250 = scalar_lea.sflag [#allocation6], %s249
        %s251 = sand.u32 %s104, 1
        %s252 = smul.addr %s251, 128
        %s253 = scalar_lea.vmem [#allocation9], %s252
        %p254 = pneg %p143
        %p255 = pneg %p140
        %p256 = scmp.lt.s32.totalorder %s28, 1
        %s257 = scalar_select %p256, %s28, 1
        %s258 = smul.addr %s257, 4
        %s259 = scalar_lea.vmem %s3, %s258
        %s260 = smul.u32 %s28, 4
        %s261 = sadd.s32 %s260, %s29
        %s262 = smul.u32 2, %s261
        %s263 = smul.u32 %s28, 4
        %s264 = sadd.s32 %s263, %s29
        %s265 = smul.u32 2, %s264
        %p266 = scmp.lt.s32.totalorder %s28, 1
        %s267 = scalar_select %p266, %s28, 1
        %s268 = smul.addr %s267, 4
        %s269 = scalar_lea.vmem %s3, %s268
        %p270 = scmp.eq.s32.totalorder %s29, 0
        // Predicated region
        $region37: #{tpu_custom_call.1} parent=27 // pred_check
          %p271 = pneg %p270
        $region38: #{tpu_custom_call.1} parent=27 // pred_check_branch
          %273 = sbr.rel (%p271) target = $region40
        $region39: #{tpu_custom_call.1} parent=27 // pred_region
          %274 = vst [vmem:[#allocation2] sm:$0xff] 0.0
          %275 = vst [vmem:[#allocation2 + $0x8] sm:$0xff] 0.0
          %276 = vst [vmem:[#allocation2 + $0x10] sm:$0xff] 0.0
          %277 = vst [vmem:[#allocation2 + $0x18] sm:$0xff] 0.0
          %278 = vst [vmem:[#allocation2 + $0x20] sm:$0xff] 0.0
          %279 = vst [vmem:[#allocation2 + $0x28] sm:$0xff] 0.0
          %280 = vst [vmem:[#allocation2 + $0x30] sm:$0xff] 0.0
          %281 = vst [vmem:[#allocation2 + $0x38] sm:$0xff] 0.0
          %282 = vst [vmem:[#allocation2 + $0x40] sm:$0xff] 0.0
          %283 = vst [vmem:[#allocation2 + $0x48] sm:$0xff] 0.0
          %284 = vst [vmem:[#allocation2 + $0x50] sm:$0xff] 0.0
          %285 = vst [vmem:[#allocation2 + $0x58] sm:$0xff] 0.0
          %286 = vst [vmem:[#allocation2 + $0x60] sm:$0xff] 0.0
          %287 = vst [vmem:[#allocation2 + $0x68] sm:$0xff] 0.0
          %288 = vst [vmem:[#allocation2 + $0x70] sm:$0xff] 0.0
          %289 = vst [vmem:[#allocation2 + $0x78] sm:$0xff] 0.0
          %290 = vst [vmem:[#allocation3] sm:$0x7] 0.0
        $region40: #{tpu_custom_call.1} parent=27 // pred_fallthru
          _
        %v291 = vld [vmem:[%s219] sm:$0xff]
        %v292 = vld [vmem:[%s219 + $0x8] sm:$0xff]
        %v293 = vld [vmem:[%s228] sm:$0xff]
        %v294 = vld [vmem:[%s228 + $0x8] sm:$0xff]
        %v295 = vld [vmem:[#allocation2] sm:$0xff]
        %v296 = vld [vmem:[#allocation2 + $0x8] sm:$0xff]
        %v297 = vld [vmem:[#allocation2 + $0x10] sm:$0xff]
        %v298 = vld [vmem:[#allocation2 + $0x18] sm:$0xff]
        %v299 = vld [vmem:[#allocation2 + $0x20] sm:$0xff]
        %v300 = vld [vmem:[#allocation2 + $0x28] sm:$0xff]
        %v301 = vld [vmem:[#allocation2 + $0x30] sm:$0xff]
        %v302 = vld [vmem:[#allocation2 + $0x38] sm:$0xff]
        %v303 = vld [vmem:[#allocation2 + $0x40] sm:$0xff]
        %v304 = vld [vmem:[#allocation2 + $0x48] sm:$0xff]
        %v305 = vld [vmem:[#allocation2 + $0x50] sm:$0xff]
        %v306 = vld [vmem:[#allocation2 + $0x58] sm:$0xff]
        %v307 = vld [vmem:[#allocation2 + $0x60] sm:$0xff]
        %v308 = vld [vmem:[#allocation2 + $0x68] sm:$0xff]
        %v309 = vld [vmem:[#allocation2 + $0x70] sm:$0xff]
        %v310 = vld [vmem:[#allocation2 + $0x78] sm:$0xff]
        %311 = vxpose.xlu0.b32.start [1/16] %v291, 128
        %312 = vxpose.xlu0.b32.cont [2/16] %v292, 128
        %313 = vxpose.xlu0.b32.cont [3/16] 0.0, 128
        %314 = vxpose.xlu0.b32.cont [4/16] 0.0, 128
        %315 = vxpose.xlu0.b32.cont [5/16] 0.0, 128
        %316 = vxpose.xlu0.b32.cont [6/16] 0.0, 128
        %317 = vxpose.xlu0.b32.cont [7/16] 0.0, 128
        %318 = vxpose.xlu0.b32.cont [8/16] 0.0, 128
        %319 = vxpose.xlu0.b32.cont [9/16] 0.0, 128
        %320 = vxpose.xlu0.b32.cont [10/16] 0.0, 128
        %321 = vxpose.xlu0.b32.cont [11/16] 0.0, 128
        %322 = vxpose.xlu0.b32.cont [12/16] 0.0, 128
        %323 = vxpose.xlu0.b32.cont [13/16] 0.0, 128
        %324 = vxpose.xlu0.b32.cont [14/16] 0.0, 128
        %325 = vxpose.xlu0.b32.cont [15/16] 0.0, 128
        %326 = vxpose.xlu0.b32.end [16/16] 0.0, 128
        %v327 = vpop.trf.xlu0
        %v328 = vpop.trf.xlu0
        %v329 = vpop.trf.xlu0
        %v330 = vpop.trf.xlu0
        %v331 = vpop.trf.xlu0
        %v332 = vpop.trf.xlu0
        %v333 = vpop.trf.xlu0
        %v334 = vpop.trf.xlu0
        %v335 = vpop.trf.xlu0
        %v336 = vpop.trf.xlu0
        %v337 = vpop.trf.xlu0
        %v338 = vpop.trf.xlu0
        %v339 = vpop.trf.xlu0
        %v340 = vpop.trf.xlu0
        %v341 = vpop.trf.xlu0
        %v342 = vpop.trf.xlu0
        %vm343 = vcmask 130048
        %v345 = vsel %vm343, %v327, 0
        %v348 = vsel %vm343, %v328, 0
        %v351 = vsel %vm343, %v329, 0
        %v354 = vsel %vm343, %v330, 0
        %v357 = vsel %vm343, %v331, 0
        %v360 = vsel %vm343, %v332, 0
        %v363 = vsel %vm343, %v333, 0
        %v366 = vsel %vm343, %v334, 0
        %v369 = vsel %vm343, %v335, 0
        %v372 = vsel %vm343, %v336, 0
        %v375 = vsel %vm343, %v337, 0
        %v378 = vsel %vm343, %v338, 0
        %v381 = vsel %vm343, %v339, 0
        %v384 = vsel %vm343, %v340, 0
        %v387 = vsel %vm343, %v341, 0
        %v390 = vsel %vm343, %v342, 0
        %392 = vmatprep.subr.mxu0 0.0
        %393 = vmatpush1.msra.mxu0 0.0
        %394 = vmatprep.subr.mxu0 0.0
        %395 = vmatpush1.msra.mxu0 0.0
        %396 = vmatprep.subr.mxu0 0.0
        %397 = vmatpush1.msra.mxu0 0.0
        %398 = vmatprep.subr.mxu0 0.0
        %399 = vmatpush1.msra.mxu0 0.0
        %400 = vmatprep.subr.mxu0 0.0
        %401 = vmatpush1.msra.mxu0 0.0
        %402 = vmatprep.subr.mxu0 0.0
        %403 = vmatpush1.msra.mxu0 0.0
        %404 = vmatprep.subr.mxu0 0.0
        %405 = vmatpush1.msra.mxu0 0.0
        %406 = vmatprep.subr.mxu0 0.0
        %407 = vmatpush1.msra.mxu0 0.0
        %408 = vmatprep.subr.mxu0 0.0
        %409 = vmatpush1.msra.mxu0 0.0
        %410 = vmatprep.subr.mxu0 0.0
        %411 = vmatpush1.msra.mxu0 0.0
        %412 = vmatprep.subr.mxu0 0.0
        %413 = vmatpush1.msra.mxu0 0.0
        %414 = vmatprep.subr.mxu0 0.0
        %415 = vmatpush1.msra.mxu0 0.0
        %416 = vmatprep.subr.mxu0 0.0
        %417 = vmatpush1.msra.mxu0 0.0
        %418 = vmatprep.subr.mxu0 0.0
        %419 = vmatpush1.msra.mxu0 0.0
        %420 = vmatprep.subr.mxu0 0.0
        %421 = vmatpush1.msra.mxu0 %v294
        %422 = vmatprep.subr.mxu0 0.0
        %423 = vmatpush1.msra.mxu0 %v293
        %424 = vmatprep.subr.mxu0 0.0
        %425 = vmatpush2.msra.mxu0 0.0
        %426 = vmatprep.subr.mxu0 0.0
        %427 = vmatpush2.msra.mxu0 0.0
        %428 = vmatprep.subr.mxu0 0.0
        %429 = vmatpush2.msra.mxu0 0.0
        %430 = vmatprep.subr.mxu0 0.0
        %431 = vmatpush2.msra.mxu0 0.0
        %432 = vmatprep.subr.mxu0 0.0
        %433 = vmatpush2.msra.mxu0 0.0
        %434 = vmatprep.subr.mxu0 0.0
        %435 = vmatpush2.msra.mxu0 0.0
        %436 = vmatprep.subr.mxu0 0.0
        %437 = vmatpush2.msra.mxu0 0.0
        %438 = vmatprep.subr.mxu0 0.0
        %439 = vmatpush2.msra.mxu0 0.0
        %440 = vmatprep.subr.mxu0 0.0
        %441 = vmatpush2.msra.mxu0 0.0
        %442 = vmatprep.subr.mxu0 0.0
        %443 = vmatpush2.msra.mxu0 0.0
        %444 = vmatprep.subr.mxu0 0.0
        %445 = vmatpush2.msra.mxu0 0.0
        %446 = vmatprep.subr.mxu0 0.0
        %447 = vmatpush2.msra.mxu0 0.0
        %448 = vmatprep.subr.mxu0 0.0
        %449 = vmatpush2.msra.mxu0 0.0
        %450 = vmatprep.subr.mxu0 0.0
        %451 = vmatpush2.msra.mxu0 0.0
        %452 = vmatprep.subr.mxu0 0.0
        %453 = vmatpush2.msra.mxu0 0.0
        %454 = vmatprep.subr.mxu0 0.0
        %455 = vmatpush2.msra.mxu0 0.0
        %456 = vmatprep.mubr.f32.mxu0 0.0
        %457 = vmatmul.mubr.f32.gmra.mxu0 %v345
        %v458 = vpop.f32.mrf.mxu0
        %v459 = vadd.f32 0.0, %v458
        %v460 = vpop.f32.mrf.mxu0
        %461 = vmatprep.mubr.f32.mxu0 0.0
        %462 = vmatmul.mubr.f32.gmra.mxu0 %v348
        %v463 = vpop.f32.mrf.mxu0
        %v464 = vadd.f32 0.0, %v463
        %v465 = vpop.f32.mrf.mxu0
        %466 = vmatprep.mubr.f32.mxu0 0.0
        %467 = vmatmul.mubr.f32.gmra.mxu0 %v351
        %v468 = vpop.f32.mrf.mxu0
        %v469 = vadd.f32 0.0, %v468
        %v470 = vpop.f32.mrf.mxu0
        %471 = vmatprep.mubr.f32.mxu0 0.0
        %472 = vmatmul.mubr.f32.gmra.mxu0 %v354
        %v473 = vpop.f32.mrf.mxu0
        %v474 = vadd.f32 0.0, %v473
        %v475 = vpop.f32.mrf.mxu0
        %476 = vmatprep.mubr.f32.mxu0 0.0
        %477 = vmatmul.mubr.f32.gmra.mxu0 %v357
        %v478 = vpop.f32.mrf.mxu0
        %v479 = vadd.f32 0.0, %v478
        %v480 = vpop.f32.mrf.mxu0
        %481 = vmatprep.mubr.f32.mxu0 0.0
        %482 = vmatmul.mubr.f32.gmra.mxu0 %v360
        %v483 = vpop.f32.mrf.mxu0
        %v484 = vadd.f32 0.0, %v483
        %v485 = vpop.f32.mrf.mxu0
        %486 = vmatprep.mubr.f32.mxu0 0.0
        %487 = vmatmul.mubr.f32.gmra.mxu0 %v363
        %v488 = vpop.f32.mrf.mxu0
        %v489 = vadd.f32 0.0, %v488
        %v490 = vpop.f32.mrf.mxu0
        %491 = vmatprep.mubr.f32.mxu0 0.0
        %492 = vmatmul.mubr.f32.gmra.mxu0 %v366
        %v493 = vpop.f32.mrf.mxu0
        %v494 = vadd.f32 0.0, %v493
        %v495 = vpop.f32.mrf.mxu0
        %496 = vmatprep.mubr.f32.mxu0 0.0
        %497 = vmatmul.mubr.f32.gmra.mxu0 %v369
        %v498 = vpop.f32.mrf.mxu0
        %v499 = vadd.f32 0.0, %v498
        %v500 = vpop.f32.mrf.mxu0
        %501 = vmatprep.mubr.f32.mxu0 0.0
        %502 = vmatmul.mubr.f32.gmra.mxu0 %v372
        %v503 = vpop.f32.mrf.mxu0
        %v504 = vadd.f32 0.0, %v503
        %v505 = vpop.f32.mrf.mxu0
        %506 = vmatprep.mubr.f32.mxu0 0.0
        %507 = vmatmul.mubr.f32.gmra.mxu0 %v375
        %v508 = vpop.f32.mrf.mxu0
        %v509 = vadd.f32 0.0, %v508
        %v510 = vpop.f32.mrf.mxu0
        %511 = vmatprep.mubr.f32.mxu0 0.0
        %512 = vmatmul.mubr.f32.gmra.mxu0 %v378
        %v513 = vpop.f32.mrf.mxu0
        %v514 = vadd.f32 0.0, %v513
        %v515 = vpop.f32.mrf.mxu0
        %516 = vmatprep.mubr.f32.mxu0 0.0
        %517 = vmatmul.mubr.f32.gmra.mxu0 %v381
        %v518 = vpop.f32.mrf.mxu0
        %v519 = vadd.f32 0.0, %v518
        %v520 = vpop.f32.mrf.mxu0
        %521 = vmatprep.mubr.f32.mxu0 0.0
        %522 = vmatmul.mubr.f32.gmra.mxu0 %v384
        %v523 = vpop.f32.mrf.mxu0
        %v524 = vadd.f32 0.0, %v523
        %v525 = vpop.f32.mrf.mxu0
        %526 = vmatprep.mubr.f32.mxu0 0.0
        %527 = vmatmul.mubr.f32.gmra.mxu0 %v387
        %v528 = vpop.f32.mrf.mxu0
        %v529 = vadd.f32 0.0, %v528
        %v530 = vpop.f32.mrf.mxu0
        %531 = vmatprep.mubr.f32.mxu0 0.0
        %532 = vmatmul.mubr.f32.gmra.mxu0 %v390
        %v533 = vpop.f32.mrf.mxu0
        %v534 = vadd.f32 0.0, %v533
        %v535 = vpop.f32.mrf.mxu0
        %536 = vdwg.mxu0
        %v537 = vadd.f32 %v295, %v459
        %v538 = vadd.f32 %v296, %v464
        %v539 = vadd.f32 %v297, %v469
        %v540 = vadd.f32 %v298, %v474
        %v541 = vadd.f32 %v299, %v479
        %v542 = vadd.f32 %v300, %v484
        %v543 = vadd.f32 %v301, %v489
        %v544 = vadd.f32 %v302, %v494
        %v545 = vadd.f32 %v303, %v499
        %v546 = vadd.f32 %v304, %v504
        %v547 = vadd.f32 %v305, %v509
        %v548 = vadd.f32 %v306, %v514
        %v549 = vadd.f32 %v307, %v519
        %v550 = vadd.f32 %v308, %v524
        %v551 = vadd.f32 %v309, %v529
        %v552 = vadd.f32 %v310, %v534
        %553 = vst [vmem:[#allocation2] sm:$0xff] %v537
        %554 = vst [vmem:[#allocation2 + $0x8] sm:$0xff] %v538
        %555 = vst [vmem:[#allocation2 + $0x10] sm:$0xff] %v539
        %556 = vst [vmem:[#allocation2 + $0x18] sm:$0xff] %v540
        %557 = vst [vmem:[#allocation2 + $0x20] sm:$0xff] %v541
        %558 = vst [vmem:[#allocation2 + $0x28] sm:$0xff] %v542
        %559 = vst [vmem:[#allocation2 + $0x30] sm:$0xff] %v543
        %560 = vst [vmem:[#allocation2 + $0x38] sm:$0xff] %v544
        %561 = vst [vmem:[#allocation2 + $0x40] sm:$0xff] %v545
        %562 = vst [vmem:[#allocation2 + $0x48] sm:$0xff] %v546
        %563 = vst [vmem:[#allocation2 + $0x50] sm:$0xff] %v547
        %564 = vst [vmem:[#allocation2 + $0x58] sm:$0xff] %v548
        %565 = vst [vmem:[#allocation2 + $0x60] sm:$0xff] %v549
        %566 = vst [vmem:[#allocation2 + $0x68] sm:$0xff] %v550
        %567 = vst [vmem:[#allocation2 + $0x70] sm:$0xff] %v551
        %568 = vst [vmem:[#allocation2 + $0x78] sm:$0xff] %v552
        %v569 = vld [vmem:[#allocation3] sm:$0x1]
        %v570 = vadd.f32 %v291, %v292
        %v571 = vrot.slane %v570, 4
        %v572 = vadd.f32 %v570, %v571
        %v573 = vrot.slane %v572, 2
        %v574 = vadd.f32 %v572, %v573
        %v575 = vrot.slane %v574, 1
        %v576 = vadd.f32 %v574, %v575
        %v577 = vadd.f32 %v569, %v576
        %578 = vst [vmem:[#allocation3] sm:$0x1] %v577
        %v579 = vld [vmem:[#allocation3 + $0x1] sm:$0x1]
        %v580 = vmul.f32 %v291, %v291
        %v581 = vmul.f32 %v292, %v292
        %v582 = vadd.f32 %v580, %v581
        %v583 = vrot.slane %v582, 4
        %v584 = vadd.f32 %v582, %v583
        %v585 = vrot.slane %v584, 2
        %v586 = vadd.f32 %v584, %v585
        %v587 = vrot.slane %v586, 1
        %v588 = vadd.f32 %v586, %v587
        %v589 = vadd.f32 %v579, %v588
        %590 = vst [vmem:[#allocation3 + $0x1] sm:$0x1] %v589
        %v591 = vld [vmem:[#allocation3 + $0x2] sm:$0x1]
        %v592 = vmul.f32 %v293, %v293
        %v593 = vmul.f32 %v294, %v294
        %v594 = vadd.f32 %v592, %v593
        %v595 = vrot.slane %v594, 4
        %v596 = vadd.f32 %v594, %v595
        %v597 = vrot.slane %v596, 2
        %v598 = vadd.f32 %v596, %v597
        %v599 = vrot.slane %v598, 1
        %v600 = vadd.f32 %v598, %v599
        %v601 = vadd.f32 %v591, %v600
        %602 = vst [vmem:[#allocation3 + $0x2] sm:$0x1] %v601
        %p603 = scmp.eq.s32.totalorder %s29, 3
        // Predicated region
        $region41: #{tpu_custom_call.1} parent=27 // pred_check
          %p604 = pneg %p603
        $region42: #{tpu_custom_call.1} parent=27 // pred_check_branch
          %606 = sbr.rel (%p604) target = $region44
        $region43: #{tpu_custom_call.1} parent=27 // pred_region
          %v607 = vld [vmem:[#allocation2] sm:$0xff]
          %v608 = vld [vmem:[#allocation2 + $0x8] sm:$0xff]
          %v609 = vld [vmem:[#allocation2 + $0x10] sm:$0xff]
          %v610 = vld [vmem:[#allocation2 + $0x18] sm:$0xff]
          %v611 = vld [vmem:[#allocation2 + $0x20] sm:$0xff]
          %v612 = vld [vmem:[#allocation2 + $0x28] sm:$0xff]
          %v613 = vld [vmem:[#allocation2 + $0x30] sm:$0xff]
          %v614 = vld [vmem:[#allocation2 + $0x38] sm:$0xff]
          %v615 = vld [vmem:[#allocation2 + $0x40] sm:$0xff]
          %v616 = vld [vmem:[#allocation2 + $0x48] sm:$0xff]
          %v617 = vld [vmem:[#allocation2 + $0x50] sm:$0xff]
          %v618 = vld [vmem:[#allocation2 + $0x58] sm:$0xff]
          %v619 = vld [vmem:[#allocation2 + $0x60] sm:$0xff]
          %v620 = vld [vmem:[#allocation2 + $0x68] sm:$0xff]
          %v621 = vld [vmem:[#allocation2 + $0x70] sm:$0xff]
          %v622 = vld [vmem:[#allocation2 + $0x78] sm:$0xff]
          %623 = vst [vmem:[%s253] sm:$0xff] %v607
          %624 = vst [vmem:[%s253 + $0x8] sm:$0xff] %v608
          %625 = vst [vmem:[%s253 + $0x10] sm:$0xff] %v609
          %626 = vst [vmem:[%s253 + $0x18] sm:$0xff] %v610
          %627 = vst [vmem:[%s253 + $0x20] sm:$0xff] %v611
          %628 = vst [vmem:[%s253 + $0x28] sm:$0xff] %v612
          %629 = vst [vmem:[%s253 + $0x30] sm:$0xff] %v613
          %630 = vst [vmem:[%s253 + $0x38] sm:$0xff] %v614
          %631 = vst [vmem:[%s253 + $0x40] sm:$0xff] %v615
          %632 = vst [vmem:[%s253 + $0x48] sm:$0xff] %v616
          %633 = vst [vmem:[%s253 + $0x50] sm:$0xff] %v617
          %634 = vst [vmem:[%s253 + $0x58] sm:$0xff] %v618
          %635 = vst [vmem:[%s253 + $0x60] sm:$0xff] %v619
          %636 = vst [vmem:[%s253 + $0x68] sm:$0xff] %v620
          %637 = vst [vmem:[%s253 + $0x70] sm:$0xff] %v621
          %638 = vst [vmem:[%s253 + $0x78] sm:$0xff] %v622
          %v639 = vld [vmem:[#allocation3] sm:$0x7]
          %640 = vst [vmem:[%s269] sm:$0x7] %v639
        $region44: #{tpu_custom_call.1} parent=27 // pred_fallthru
          _
        %s641 = sand.u32 %s104, 1
        %s642 = scalar_lea.sflag [#allocation6], %s641
        %s643 = sand.u32 %s104, 1
        %s644 = smul.addr %s643, 128
        %s645 = scalar_lea.vmem [#allocation9], %s644
        %p646 = scmp.lt.s32.totalorder %s28, 1
        %s647 = scalar_select %p646, %s28, 1
        %s648 = smul.addr %s647, 4
        %s649 = scalar_lea.vmem %s3, %s648
        // Predicated region
        $region45: #{tpu_custom_call.1} parent=27 // pred_check
          %p650 = pneg %p114
        $region46: #{tpu_custom_call.1} parent=27 // pred_check_branch
          %652 = sbr.rel (%p650) target = $region48
        $region47: #{tpu_custom_call.1} parent=27 // pred_region
          %s654 = ssub.s32 2048, 2048
          %655 = vsyncadd %s642, %s654
          %s656 = smul.addr %s28, 16
          %s657 = smul.addr %s656, 128
          %s658 = scalar_lea.hbm %s2, %s657
          %s659 = sshll.u32 %s645, 4
          %s660 = int_to_ptr.vmem [resolvable:$true] %s659
          %665 = dma.vmem_to_hbm [thread:$0]  %s660, 2048, %s658, %s642, 128, 128, 8
        $region48: #{tpu_custom_call.1} parent=27 // pred_fallthru
          _
        // Predicated region
        $region49: #{tpu_custom_call.1} parent=27 // pred_check
          %p666 = pneg %p140
        $region50: #{tpu_custom_call.1} parent=27 // pred_check_branch
          %668 = sbr.rel (%p666) target = $region52
        $region51: #{tpu_custom_call.1} parent=27 // pred_region
          _
        $region52: #{tpu_custom_call.1} parent=27 // pred_fallthru
          _
      $region28: #{tpu_custom_call.1} parent=5 // pred_fallthru
        _
      %p669 = scmp.le.s32.totalorder 2, %s19
      // Predicated region
      $region53: #{tpu_custom_call.1} parent=5 // pred_check
        %p670 = pneg %p669
      $region54: #{tpu_custom_call.1} parent=5 // pred_check_branch
        %672 = sbr.rel (%p670) target = $region56
      $region55: #{tpu_custom_call.1} parent=5 // pred_region
        %s673 = ssub.s32 %s19, 2
        // Predicated region
        $region57: #{tpu_custom_call.1} parent=55 // pred_check
          %p674 = pneg %p120
        $region58: #{tpu_custom_call.1} parent=55 // pred_check_branch
          %676 = sbr.rel (%p674) target = $region60
        $region59: #{tpu_custom_call.1} parent=55 // pred_region
          %s677 = sand.u32 %s105, 1
          %s678 = scalar_lea.sflag [#allocation6], %s677
          %s679 = sand.u32 %s105, 1
          %s680 = smul.addr %s679, 128
          %s681 = scalar_lea.vmem [#allocation9], %s680
          %682 = dma.done %s678, 2048
        $region60: #{tpu_custom_call.1} parent=55 // pred_fallthru
          _
        // Predicated region
        $region61: #{tpu_custom_call.1} parent=55 // pred_check
          %p683 = pneg %p146
        $region62: #{tpu_custom_call.1} parent=55 // pred_check_branch
          %685 = sbr.rel (%p683) target = $region64
        $region63: #{tpu_custom_call.1} parent=55 // pred_region
          %p686 = scmp.lt.s32.totalorder %s30, 1
          %s687 = scalar_select %p686, %s30, 1
          %s688 = smul.addr %s687, 4
          %s689 = scalar_lea.vmem %s3, %s688
        $region64: #{tpu_custom_call.1} parent=55 // pred_fallthru
          _
      $region56: #{tpu_custom_call.1} parent=5 // pred_fallthru
        _
    $region6: #{tpu_custom_call.1} parent=1 // loop_footer
      %s23 = sadd.s32 1, %s19
    $region7: #{tpu_custom_call.1} parent=1 // loop_footer_branch
      %18 = sbr.rel target = $region3
    $region8: #{tpu_custom_call.1} parent=1 // loop_exit
      _
    %690 = vsyncpa [#allocation5], 1
    %s691 = scalar_lea.sflag [#allocation5], 1
    %692 = vsyncpa %s691, 1
    %693 = vsyncpa [#allocation8], 1
    %s694 = scalar_lea.sflag [#allocation8], 1
    %695 = vsyncpa %s694, 1
    %696 = vsyncpa [#allocation6], 1
    %s697 = scalar_lea.sflag [#allocation6], 1
    %698 = vsyncpa %s697, 1

</llo_original>
